<compile_context>
chip_gen: v5e
topology: v5e:2x2
jax: 0.10.0
libtpu: 0.0.40
codegen_flags: <defaults>
</compile_context>

<pallas_src>
import jax
import jax.numpy as jnp
from jax.experimental import pallas as pl
from jax.experimental.pallas import tpu as pltpu

# Batch-tile alignment: 16 covers f32 (8-row) and bf16 (16-row) sublane packing.
BATCH_ALIGN = 16


def _round_up(n, m):
    return ((n + m - 1) // m) * m


def _qnet_kernel(x_ref, w1_ref, b1_ref, w2_ref, b2_ref, o_ref):
    # Fused: matmul1 (MXU) -> bias + ReLU (VPU, f32) -> matmul2 (MXU) -> bias -> store.
    h = jnp.dot(x_ref[...], w1_ref[...], preferred_element_type=jnp.float32)
    h = jnp.maximum(h + b1_ref[...].astype(jnp.float32), 0.0)   # bias + ReLU in f32
    w2 = w2_ref[...]
    # Cast only at the MXU input (no-op for f32 params; halves MXU passes for bf16).
    y = jnp.dot(h.astype(w2.dtype), w2, preferred_element_type=jnp.float32)
    y = y + b2_ref[...].astype(jnp.float32)
    o_ref[...] = y.astype(o_ref.dtype)


def init_params(key, input_size, hidden_size, output_size, dtype=jnp.float32):
    """PyTorch nn.Linear default init: U[-1/sqrt(fan_in), 1/sqrt(fan_in)].

    Returns pre-transposed weights: w1 (in, hid), w2 (hid, out), biases as (1, n).
    """
    k1, k2, k3, k4 = jax.random.split(key, 4)
    bound1 = 1.0 / (input_size ** 0.5)
    bound2 = 1.0 / (hidden_size ** 0.5)
    w1 = jax.random.uniform(k1, (input_size, hidden_size), dtype, -bound1, bound1)
    b1 = jax.random.uniform(k2, (1, hidden_size), dtype, -bound1, bound1)
    w2 = jax.random.uniform(k3, (hidden_size, output_size), dtype, -bound2, bound2)
    b2 = jax.random.uniform(k4, (1, output_size), dtype, -bound2, bound2)
    return w1, b1, w2, b2


def linear_qnet_forward(x, w1, b1, w2, b2, *, block_b=512):
    """Forward pass: relu(x @ w1 + b1) @ w2 + b2.

    x: (B, in_features).  Params are unpadded, pre-transposed (see init_params).
    Output: (B, out_features) in x.dtype; matmul accumulation and bias/ReLU in f32.
    """
    B, in_s = x.shape
    hid = w1.shape[1]
    out_s = w2.shape[1]
    assert w1.shape == (in_s, hid) and b1.shape == (1, hid)
    assert w2.shape == (hid, out_s) and b2.shape == (1, out_s)

    # Batch tile: at most block_b rows, sublane-aligned, clamped so a batch slightly
    # over the tile doesn't double the grid.  The last block may run past B (see
    # module docstring) — out-of-bounds output rows are discarded on store.
    tb = min(_round_up(block_b, BATCH_ALIGN),
             _round_up(max(B, BATCH_ALIGN), BATCH_ALIGN))
    grid = (pl.cdiv(B, tb),)

    # Scheduler hint computed from logical (unpadded) sizes.
    x_bytes = jnp.dtype(x.dtype).itemsize
    p_bytes = jnp.dtype(w1.dtype).itemsize
    cost = pl.CostEstimate(
        flops=2 * B * (in_s * hid + hid * out_s),
        bytes_accessed=x_bytes * (B * in_s + B * out_s)
        + p_bytes * (in_s * hid + hid + hid * out_s + out_s),
        transcendentals=0,
    )

    return pl.pallas_call(
        _qnet_kernel,
        out_shape=jax.ShapeDtypeStruct((B, out_s), x.dtype),
        grid=grid,
        in_specs=[
            pl.BlockSpec((tb, in_s), lambda i: (i, 0)),    # x: streamed over batch, full feature dim
            pl.BlockSpec((in_s, hid), lambda i: (0, 0)),   # w1: VMEM-resident
            pl.BlockSpec((1, hid), lambda i: (0, 0)),      # b1: VMEM-resident
            pl.BlockSpec((hid, out_s), lambda i: (0, 0)),  # w2: VMEM-resident
            pl.BlockSpec((1, out_s), lambda i: (0, 0)),    # b2: VMEM-resident
        ],
        out_specs=pl.BlockSpec((tb, out_s), lambda i: (i, 0)),
        # TODO(synk): on v7x, pltpu.CORE_PARALLEL on this axis (with a >=2-step grid)
        # would shard batch tiles across both TensorCores; "parallel" is the portable
        # choice for single-TC v5e/v6e.
        compiler_params=pltpu.CompilerParams(dimension_semantics=("parallel",)),
        cost_estimate=cost,
    )(x, w1, b1, w2, b2)


def _ref_fwd(x, w1, b1, w2, b2):
    return jnp.maximum(x @ w1 + b1, 0.0) @ w2 + b2


if __name__ == "__main__":
    # Typical Linear_QNet (snake-AI) sizes, kept small: input=11, hidden=32, output=3.
    IN, HID, OUT = 11, 32, 3
    key = jax.random.PRNGKey(0)
    kx, kp, kx2 = jax.random.split(key, 3)

    w1, b1, w2, b2 = init_params(kp, IN, HID, OUT)

    # --- small-batch (inference-style) check: single partial block ---
    x = jax.random.normal(kx, (2, IN), dtype=jnp.float32)
    out = jax.block_until_ready(linear_qnet_forward(x, w1, b1, w2, b2))
    assert out.shape == (2, OUT)
    assert jnp.allclose(out, _ref_fwd(x, w1, b1, w2, b2), atol=1e-5, rtol=1e-5)

    # --- batched (training-style) check: 2-step grid with a ragged edge block ---
    x2 = jax.random.normal(kx2, (300, IN), dtype=jnp.float32)
    out2 = jax.block_until_ready(linear_qnet_forward(x2, w1, b1, w2, b2, block_b=256))
    assert out2.shape == (300, OUT)
    assert jnp.allclose(out2, _ref_fwd(x2, w1, b1, w2, b2), atol=1e-5, rtol=1e-5)

    # --- bf16 storage path (v6e/v7x bandwidth win); accumulation stays f32 ---
    xb = x2.astype(jnp.bfloat16)
    w1b, b1b, w2b, b2b = (p.astype(jnp.bfloat16) for p in (w1, b1, w2, b2))
    out_bf = jax.block_until_ready(linear_qnet_forward(xb, w1b, b1b, w2b, b2b))
    assert out_bf.shape == (300, OUT)
    assert jnp.allclose(out_bf.astype(jnp.float32),
                        _ref_fwd(x2, w1, b1, w2, b2), atol=1e-1, rtol=1e-1)

    # TODO(synk): torch.save/torch.load checkpoint I/O from the original module is
    # host-side file handling, not a kernel concern; omitted here.
    print("KERNEL_OK")
</pallas_src>

<mosaic_0001>
module attributes {stable_mosaic.version = 11 : i64} {
  func.func @_qnet_kernel(%arg0: i32, %arg1: memref<16x11xf32, #tpu.memory_space<vmem>>, %arg2: memref<11x32xf32, #tpu.memory_space<vmem>>, %arg3: memref<1x32xf32, #tpu.memory_space<vmem>>, %arg4: memref<32x3xf32, #tpu.memory_space<vmem>>, %arg5: memref<1x3xf32, #tpu.memory_space<vmem>>, %arg6: memref<16x3xf32, #tpu.memory_space<vmem>>) attributes {dimension_semantics = [#tpu.dimension_semantics<parallel>], iteration_bounds = array<i64: 1>, scalar_prefetch = 0 : i64, scratch_operands = 0 : i64, tpu.core_type = #tpu.core_type<tc>, window_params = [{transform_indices = @transform_0, window_bounds = array<i64: 16, 11>}, {pipeline_mode = #tpu.pipeline_mode<synchronous>, transform_indices = @transform_1, window_bounds = array<i64: 11, 32>}, {pipeline_mode = #tpu.pipeline_mode<synchronous>, transform_indices = @transform_2, window_bounds = array<i64: 1, 32>}, {pipeline_mode = #tpu.pipeline_mode<synchronous>, transform_indices = @transform_3, window_bounds = array<i64: 32, 3>}, {pipeline_mode = #tpu.pipeline_mode<synchronous>, transform_indices = @transform_4, window_bounds = array<i64: 1, 3>}, {transform_indices = @transform_5, window_bounds = array<i64: 16, 3>}]} {
    %c0 = arith.constant 0 : index
    %c0_0 = arith.constant 0 : index
    %0 = vector.load %arg1[%c0, %c0_0] : memref<16x11xf32, #tpu.memory_space<vmem>>, vector<16x11xf32>
    %c0_1 = arith.constant 0 : index
    %c0_2 = arith.constant 0 : index
    %1 = vector.load %arg2[%c0_1, %c0_2] : memref<11x32xf32, #tpu.memory_space<vmem>>, vector<11x32xf32>
    %cst = arith.constant dense<0.000000e+00> : vector<16x32xf32>
    %2 = tpu.matmul %0, %1, %cst {dimension_numbers = #tpu.dot_dimension_numbers<[1], [0], [0], [1], [0, 0, 1, 1], [], []>} : vector<16x11xf32>, vector<11x32xf32>, vector<16x32xf32> -> vector<16x32xf32>
    %c0_3 = arith.constant 0 : index
    %c0_4 = arith.constant 0 : index
    %3 = vector.load %arg3[%c0_3, %c0_4] : memref<1x32xf32, #tpu.memory_space<vmem>>, vector<1x32xf32>
    %4 = vector.broadcast %3 : vector<1x32xf32> to vector<16x32xf32>
    %5 = arith.addf %2, %4 : vector<16x32xf32>
    %cst_5 = arith.constant 0.000000e+00 : f32
    %6 = vector.broadcast %cst_5 : f32 to vector<16x32xf32>
    %7 = arith.maximumf %5, %6 : vector<16x32xf32>
    %c0_6 = arith.constant 0 : index
    %c0_7 = arith.constant 0 : index
    %8 = vector.load %arg4[%c0_6, %c0_7] : memref<32x3xf32, #tpu.memory_space<vmem>>, vector<32x3xf32>
    %cst_8 = arith.constant dense<0.000000e+00> : vector<16x3xf32>
    %9 = tpu.matmul %7, %8, %cst_8 {dimension_numbers = #tpu.dot_dimension_numbers<[1], [0], [0], [1], [0, 0, 1, 1], [], []>} : vector<16x32xf32>, vector<32x3xf32>, vector<16x3xf32> -> vector<16x3xf32>
    %c0_9 = arith.constant 0 : index
    %c0_10 = arith.constant 0 : index
    %10 = vector.load %arg5[%c0_9, %c0_10] : memref<1x3xf32, #tpu.memory_space<vmem>>, vector<1x3xf32>
    %11 = vector.broadcast %10 : vector<1x3xf32> to vector<16x3xf32>
    %12 = arith.addf %9, %11 : vector<16x3xf32>
    %c0_11 = arith.constant 0 : index
    %c0_12 = arith.constant 0 : index
    %13 = vector.load %arg6[%c0_11, %c0_12] : memref<16x3xf32, #tpu.memory_space<vmem>>, vector<16x3xf32>
    tpu.vector_store %arg6[%c0_11, %c0_12], %12 {strides = array<i32>} : memref<16x3xf32, #tpu.memory_space<vmem>>, vector<16x3xf32>,
    return
  }
  func.func @transform_0(%arg0: i32) -> (i32, i32) {
    %c0_i32 = arith.constant 0 : i32
    %c0_i32_0 = arith.constant 0 : i32
    return %arg0, %c0_i32 : i32, i32
  }
  func.func @transform_1(%arg0: i32) -> (i32, i32) {
    %c0_i32 = arith.constant 0 : i32
    %c0_i32_0 = arith.constant 0 : i32
    %c0_i32_1 = arith.constant 0 : i32
    return %c0_i32, %c0_i32_0 : i32, i32
  }
  func.func @transform_2(%arg0: i32) -> (i32, i32) {
    %c0_i32 = arith.constant 0 : i32
    %c0_i32_0 = arith.constant 0 : i32
    %c0_i32_1 = arith.constant 0 : i32
    return %c0_i32, %c0_i32_0 : i32, i32
  }
  func.func @transform_3(%arg0: i32) -> (i32, i32) {
    %c0_i32 = arith.constant 0 : i32
    %c0_i32_0 = arith.constant 0 : i32
    %c0_i32_1 = arith.constant 0 : i32
    return %c0_i32, %c0_i32_0 : i32, i32
  }
  func.func @transform_4(%arg0: i32) -> (i32, i32) {
    %c0_i32 = arith.constant 0 : i32
    %c0_i32_0 = arith.constant 0 : i32
    %c0_i32_1 = arith.constant 0 : i32
    return %c0_i32, %c0_i32_0 : i32, i32
  }
  func.func @transform_5(%arg0: i32) -> (i32, i32) {
    %c0_i32 = arith.constant 0 : i32
    %c0_i32_0 = arith.constant 0 : i32
    return %arg0, %c0_i32 : i32, i32
  }
}

</mosaic_0001>

<llo_original>
// kernel: tpu_custom_call.1
$region0: #{tpu_custom_call.1}
  #allocation0 [shape = 'u32[]', space=smem, size = 0x4, offset = 0x4, fixed_abs, tag = 'smem constant byte address 0x4 - core index']
  #allocation1 [shape = 'u32[72,128]{1,0:T(1,128)}', space=vmem, size = 0x9000, scoped, tag = 'internal scratch']
  %s0 = inlined_call_operand.vmem [shape: f32[2,11], index: 0, kind: input, shape index: {}]
  %s1 = inlined_call_operand.vmem [shape: f32[11,32], index: 1, kind: input, shape index: {}]
  %s2 = inlined_call_operand.vmem [shape: f32[1,32], index: 2, kind: input, shape index: {}]
  %s3 = inlined_call_operand.vmem [shape: f32[32,3], index: 3, kind: input, shape index: {}]
  %s4 = inlined_call_operand.vmem [shape: f32[1,3], index: 4, kind: input, shape index: {}]
  %s5 = inlined_call_operand.hbm [shape: f32[2,3], index: 5, kind: output, shape index: {}]
  %s6 = sld [smem:[#allocation0]]
  $region30: #{tpu_custom_call.1} parent=0
    _
  %s8 = ssub.s32 1, %s6
  %s9 = scalar_select 0, %s8, %s6
  $region1: #{tpu_custom_call.1} parent=0
    #allocation2 [shape = 'u8[8192]{0}', space=vmem, size = 0x2000, scoped, tag = 'output window, operand 0, single buffered']
    #allocation3 [shape = 's32[1]{0}', space=sflag, size = 0x4, scoped, tag = 'scoped memory for tpu_custom_call.1']
    %10 = vsyncpa [#allocation3], 0
    // Predicated region
    $region2: #{tpu_custom_call.1} parent=1 // pred_check
      _
    $region3: #{tpu_custom_call.1} parent=1 // pred_check_branch
      %12 = sbr.rel (0) target = $region5
    $region4: #{tpu_custom_call.1} parent=1 // pred_region
      _
    $region5: #{tpu_custom_call.1} parent=1 // pred_fallthru
      _
    // Predicated region
    $region6: #{tpu_custom_call.1} parent=1 // pred_check
      _
    $region7: #{tpu_custom_call.1} parent=1 // pred_check_branch
      %14 = sbr.rel (0) target = $region9
    $region8: #{tpu_custom_call.1} parent=1 // pred_region
      _
    $region9: #{tpu_custom_call.1} parent=1 // pred_fallthru
      _
    // Predicated region
    $region10: #{tpu_custom_call.1} parent=1 // pred_check
      _
    $region11: #{tpu_custom_call.1} parent=1 // pred_check_branch
      %16 = sbr.rel (0) target = $region13
    $region12: #{tpu_custom_call.1} parent=1 // pred_region
      _
    $region13: #{tpu_custom_call.1} parent=1 // pred_fallthru
      _
    // Predicated region
    $region14: #{tpu_custom_call.1} parent=1 // pred_check
      _
    $region15: #{tpu_custom_call.1} parent=1 // pred_check_branch
      %18 = sbr.rel (0) target = $region17
    $region16: #{tpu_custom_call.1} parent=1 // pred_region
      _
    $region17: #{tpu_custom_call.1} parent=1 // pred_fallthru
      _
    // Predicated region
    $region18: #{tpu_custom_call.1} parent=1 // pred_check
      _
    $region19: #{tpu_custom_call.1} parent=1 // pred_check_branch
      %20 = sbr.rel (0) target = $region21
    $region20: #{tpu_custom_call.1} parent=1 // pred_region
      _
    $region21: #{tpu_custom_call.1} parent=1 // pred_fallthru
      _
    %v21 = vld [vmem:[%s0] sm:$0xff]
    %v22 = vld [vmem:[%s0 + $0x8] sm:$0xff]
    %v23 = vld [vmem:[%s1] sm:$0xff]
    %v24 = vld [vmem:[%s1 + $0x8] sm:$0x7]
    %v25 = vld [vmem:[%s2] sm:$0x1]
    %v27 = vperm.slane %v25, 0
    %vm29 = vcmask 89088
    %v31 = vsel %vm29, %v21, 0
    %v34 = vsel %vm29, %v22, 0
    %vm36 = vcmask 1042432
    %v38 = vsel %vm36, %v24, 0
    %40 = vmatpush.msra.mxu0 0.0
    %41 = vmatpush.msra.mxu0 0.0
    %42 = vmatpush.msra.mxu0 0.0
    %43 = vmatpush.msra.mxu0 0.0
    %44 = vmatpush.msra.mxu0 0.0
    %45 = vmatpush.msra.mxu0 0.0
    %46 = vmatpush.msra.mxu0 0.0
    %47 = vmatpush.msra.mxu0 0.0
    %48 = vmatpush.msra.mxu0 0.0
    %49 = vmatpush.msra.mxu0 0.0
    %50 = vmatpush.msra.mxu0 0.0
    %51 = vmatpush.msra.mxu0 0.0
    %52 = vmatpush.msra.mxu0 0.0
    %53 = vmatpush.msra.mxu0 0.0
    %54 = vmatpush.msra.mxu0 %v38
    %55 = vmatpush.msra.mxu0 %v23
    %56 = vmatmul.f32.gmra.mxu0 %v31
    %v57 = vpop.f32.mrf.mxu0
    %v58 = vadd.f32 %v27, %v57
    %59 = vmatmul.f32.gmra.mxu0 %v34
    %v60 = vpop.f32.mrf.mxu0
    %v61 = vadd.f32 %v27, %v60
    %62 = vdwg.mxu0
    %v63 = vmax.f32 %v58, 0.0
    %v64 = vmax.f32 %v61, 0.0
    %v65 = vld [vmem:[%s3] sm:$0xff]
    %v66 = vld [vmem:[%s3 + $0x8] sm:$0xff]
    %v67 = vld [vmem:[%s3 + $0x10] sm:$0xff]
    %v68 = vld [vmem:[%s3 + $0x18] sm:$0xff]
    %v69 = vld [vmem:[%s4] sm:$0x1]
    %v71 = vperm.slane %v69, 0
    %vm73 = vcmask 261120
    %v75 = vsel %vm73, %v63, 0
    %v78 = vsel %vm73, %v64, 0
    %80 = vmatpush.msra.mxu0 0.0
    %81 = vmatpush.msra.mxu0 0.0
    %82 = vmatpush.msra.mxu0 0.0
    %83 = vmatpush.msra.mxu0 0.0
    %84 = vmatpush.msra.mxu0 0.0
    %85 = vmatpush.msra.mxu0 0.0
    %86 = vmatpush.msra.mxu0 0.0
    %87 = vmatpush.msra.mxu0 0.0
    %88 = vmatpush.msra.mxu0 0.0
    %89 = vmatpush.msra.mxu0 0.0
    %90 = vmatpush.msra.mxu0 0.0
    %91 = vmatpush.msra.mxu0 0.0
    %92 = vmatpush.msra.mxu0 %v68
    %93 = vmatpush.msra.mxu0 %v67
    %94 = vmatpush.msra.mxu0 %v66
    %95 = vmatpush.msra.mxu0 %v65
    %96 = vmatmul.f32.gmra.mxu0 %v75
    %v97 = vpop.f32.mrf.mxu0
    %v98 = vadd.f32 %v71, %v97
    %99 = vmatmul.f32.gmra.mxu0 %v78
    %v100 = vpop.f32.mrf.mxu0
    %v101 = vadd.f32 %v71, %v100
    %102 = vdwg.mxu0
    %vm103 = vcmask 23552
    %104 = vst.msk [vmem:[#allocation2] sm:$0xff] %vm103, %v98
    %105 = vst.msk [vmem:[#allocation2 + $0x8] sm:$0xff] %vm103, %v101
    // Predicated region
    $region22: #{tpu_custom_call.1} parent=1 // pred_check
      _
    $region23: #{tpu_custom_call.1} parent=1 // pred_check_branch
      %107 = sbr.rel (0) target = $region25
    $region24: #{tpu_custom_call.1} parent=1 // pred_region
      %109 = vsyncadd [#allocation3], 224
      %s110 = sshll.u32 [#allocation2], 4
      %s111 = int_to_ptr.vmem [resolvable:$true] %s110
      %s112 = sshll.u32 %s5, 4
      %s113 = int_to_ptr.hbm [resolvable:$true] %s112
      %118 = dma.vmem_to_hbm [thread:$0]  %s111, 32, %s113, [#allocation3], 32, 32, 2
    $region25: #{tpu_custom_call.1} parent=1 // pred_fallthru
      _
    // Predicated region
    $region26: #{tpu_custom_call.1} parent=1 // pred_check
      _
    $region27: #{tpu_custom_call.1} parent=1 // pred_check_branch
      %120 = sbr.rel (0) target = $region29
    $region28: #{tpu_custom_call.1} parent=1 // pred_region
      %122 = dma.done [#allocation3], 256
    $region29: #{tpu_custom_call.1} parent=1 // pred_fallthru
      _
    %123 = vsyncpa [#allocation3], 1

</llo_original>
